<compile_context>
chip_gen: v7x
topology: tpu7x:2x2x1
jax: 0.10.0
libtpu: 0.0.40
codegen_flags: <defaults>
</compile_context>

<pallas_src>
import jax
import jax.numpy as jnp
from jax.experimental import pallas as pl
from jax.experimental.pallas import tpu as pltpu


# -------------------- helpers --------------------

def _round_up(x, m):
    return ((x + m - 1) // m) * m


def _pad2d(a, rows, cols):
    return jnp.pad(a, ((0, rows - a.shape[0]), (0, cols - a.shape[1])))


# -------------------- fused Pallas kernel --------------------

def make_fused_gcn_kernel(num_gc_layers, nclass):
    """Builds a kernel computing the full GCN forward pass in one shot.

    Ref order: x, adj, (w_i, b_i) * num_gc_layers, w_fc(^T), b_fc, out.
    All refs are whole-array VMEM tiles; intermediates stay on-chip.
    """

    def kernel(*refs):
        x = refs[0][...]
        adj = refs[1][...]
        idx = 2

        h = x
        for _ in range(num_gc_layers):
            w = refs[idx][...]
            b = refs[idx + 1][...]
            idx += 2
            # GraphConvolution: support = h @ W ; agg = adj @ support ; + bias
            support = jnp.dot(h, w, preferred_element_type=jnp.float32)
            agg = jnp.dot(adj, support, preferred_element_type=jnp.float32)
            # ReLU activation (dropout is identity in eval mode)
            h = jnp.maximum(agg + b, 0.0)

        w_fc = refs[idx][...]       # already stored [hidden, nclass_pad]
        b_fc = refs[idx + 1][...]
        out_ref = refs[idx + 2]

        logits = jnp.dot(h, w_fc, preferred_element_type=jnp.float32) + b_fc

        # Mask padded class columns so they do not perturb the log-softmax.
        col = jax.lax.broadcasted_iota(jnp.int32, logits.shape, 1)
        logits = jnp.where(col < nclass, logits, jnp.float32(-1e30))

        m = jnp.max(logits, axis=1, keepdims=True)
        shifted = logits - m
        lse = jnp.log(jnp.sum(jnp.exp(shifted), axis=1, keepdims=True))
        out_ref[...] = (shifted - lse).astype(out_ref.dtype)

    return kernel


# -------------------- wrapper --------------------

def cora_gcn_forward(x, adj, params):
    """Full forward pass (eval mode). Pads to TPU-friendly shapes, runs one
    fused pallas_call, slices the result back to the true (N, nclass) shape."""
    n, nfeat = x.shape
    gc_layers = params["gc_layers"]
    w_fc_t, b_fc = params["fc_final"]      # w_fc_t pre-transposed: [hidden, nclass]
    nclass = w_fc_t.shape[1]

    # Pad node dim and every feature/lane dim to hardware-friendly multiples.
    n_pad = _round_up(n, 128)              # MXU-shaped node block, lane-dense adj
    f_pad = _round_up(nfeat, 128)

    x_p = _pad2d(x, n_pad, f_pad)
    adj_p = _pad2d(adj, n_pad, n_pad)

    operands = [x_p, adj_p]
    in_dim_pad = f_pad
    for (w, b) in gc_layers:
        out_dim_pad = _round_up(w.shape[1], 128)
        operands.append(_pad2d(w, in_dim_pad, out_dim_pad))
        operands.append(_pad2d(b, 1, out_dim_pad))
        in_dim_pad = out_dim_pad

    c_pad = _round_up(nclass, 128)
    operands.append(_pad2d(w_fc_t, in_dim_pad, c_pad))
    operands.append(_pad2d(b_fc, 1, c_pad))

    kernel = make_fused_gcn_kernel(len(gc_layers), nclass)

    vmem_spec = pl.BlockSpec(memory_space=pltpu.MemorySpace.VMEM)
    out_p = pl.pallas_call(
        kernel,
        out_shape=jax.ShapeDtypeStruct((n_pad, c_pad), jnp.float32),
        in_specs=[vmem_spec] * len(operands),
        out_specs=vmem_spec,
        compiler_params=pltpu.CompilerParams(vmem_limit_bytes=64 * 1024 * 1024),
    )(*operands)

    return out_p[:n, :nclass]


# -------------------- deterministic parameter init --------------------

def init_params(key, nfeat, hidden1, hidden2, nclass):
    """Mirrors GraphConvolution.reset_parameters / nn.Linear shapes.
    fc_final weight is stored pre-transposed [hidden, nclass]."""

    def gc_init(k, fan_in, fan_out):
        k_w, k_b = jax.random.split(k)
        stdv = 1.0 / (fan_out ** 0.5)
        w = jax.random.uniform(k_w, (fan_in, fan_out), jnp.float32, -stdv, stdv)
        b = jax.random.uniform(k_b, (fan_out,), jnp.float32, -stdv, stdv)
        return w, b.reshape(1, fan_out)

    k1, k2, k3 = jax.random.split(key, 3)
    gc1 = gc_init(k1, nfeat, hidden1)
    gc2 = gc_init(k2, hidden1, hidden2)

    # nn.Linear(hidden2, nclass): weight [nclass, hidden2] -> store transposed once.
    k_w, k_b = jax.random.split(k3)
    bound = 1.0 / (hidden2 ** 0.5)
    w_fc = jax.random.uniform(k_w, (nclass, hidden2), jnp.float32, -bound, bound)
    b_fc = jax.random.uniform(k_b, (nclass,), jnp.float32, -bound, bound).reshape(1, nclass)
    w_fc_t = jnp.transpose(w_fc)           # [hidden2, nclass], done once at init

    return {"gc_layers": [gc1, gc2], "fc_final": (w_fc_t, b_fc)}


# -------------------- pure-JAX reference (correctness check) --------------------

def reference_forward(x, adj, params):
    h = x
    for (w, b) in params["gc_layers"]:
        h = jnp.maximum(adj @ (h @ w) + b, 0.0)
    w_fc_t, b_fc = params["fc_final"]
    logits = h @ w_fc_t + b_fc
    return jax.nn.log_softmax(logits, axis=1)


# -------------------- main --------------------

if __name__ == "__main__":
    key = jax.random.PRNGKey(0)
    k_x, k_adj, k_p = jax.random.split(key, 3)

    # Small synthetic "Cora-like" graph
    N = 8        # number of nodes
    NFEAT = 16   # input feature dim
    HID1 = 32    # hidden1
    HID2 = 32    # hidden2
    NCLASS = 8   # number of classes

    x = jax.random.normal(k_x, (N, NFEAT), dtype=jnp.float32)

    # Build a row-normalized dense adjacency with self-loops (D^-1 (A + I))
    raw = (jax.random.uniform(k_adj, (N, N)) > 0.6).astype(jnp.float32)
    adj = jnp.maximum(raw, raw.T) + jnp.eye(N, dtype=jnp.float32)
    deg = jnp.sum(adj, axis=1, keepdims=True)
    adj = adj / deg

    params = init_params(k_p, NFEAT, HID1, HID2, NCLASS)

    out = cora_gcn_forward(x, adj, params)
    out = jax.block_until_ready(out)

    # correctness vs. pure-JAX reference
    ref = reference_forward(x, adj, params)
    assert out.shape == (N, NCLASS)
    assert bool(jnp.all(jnp.abs(out - ref) < 1e-4))

    # sanity: log_softmax rows should sum (in prob space) to ~1
    row_prob = jnp.exp(out).sum(axis=1)
    assert bool(jnp.all(jnp.abs(row_prob - 1.0) < 1e-4))

    print("KERNEL_OK")
</pallas_src>

<mosaic_0001>
module attributes {stable_mosaic.version = 11 : i64} {
  func.func @kernel(%arg0: memref<128x128xf32, #tpu.memory_space<vmem>>, %arg1: memref<128x128xf32, #tpu.memory_space<vmem>>, %arg2: memref<128x128xf32, #tpu.memory_space<vmem>>, %arg3: memref<1x128xf32, #tpu.memory_space<vmem>>, %arg4: memref<128x128xf32, #tpu.memory_space<vmem>>, %arg5: memref<1x128xf32, #tpu.memory_space<vmem>>, %arg6: memref<128x128xf32, #tpu.memory_space<vmem>>, %arg7: memref<1x128xf32, #tpu.memory_space<vmem>>, %arg8: memref<128x128xf32, #tpu.memory_space<vmem>>) attributes {dimension_semantics = [], scalar_prefetch = 0 : i64, scratch_operands = 0 : i64, tpu.core_type = #tpu.core_type<tc>} {
    %c0 = arith.constant 0 : index
    %c0_0 = arith.constant 0 : index
    %0 = vector.load %arg0[%c0, %c0_0] : memref<128x128xf32, #tpu.memory_space<vmem>>, vector<128x128xf32>
    %c0_1 = arith.constant 0 : index
    %c0_2 = arith.constant 0 : index
    %1 = vector.load %arg1[%c0_1, %c0_2] : memref<128x128xf32, #tpu.memory_space<vmem>>, vector<128x128xf32>
    %c0_3 = arith.constant 0 : index
    %c0_4 = arith.constant 0 : index
    %2 = vector.load %arg2[%c0_3, %c0_4] : memref<128x128xf32, #tpu.memory_space<vmem>>, vector<128x128xf32>
    %c0_5 = arith.constant 0 : index
    %c0_6 = arith.constant 0 : index
    %3 = vector.load %arg3[%c0_5, %c0_6] : memref<1x128xf32, #tpu.memory_space<vmem>>, vector<1x128xf32>
    %cst = arith.constant dense<0.000000e+00> : vector<128x128xf32>
    %4 = tpu.matmul %0, %2, %cst {dimension_numbers = #tpu.dot_dimension_numbers<[1], [0], [0], [1], [0, 0, 1, 1], [], []>} : vector<128x128xf32>, vector<128x128xf32>, vector<128x128xf32> -> vector<128x128xf32>
    %cst_7 = arith.constant dense<0.000000e+00> : vector<128x128xf32>
    %5 = tpu.matmul %1, %4, %cst_7 {dimension_numbers = #tpu.dot_dimension_numbers<[1], [0], [0], [1], [0, 0, 1, 1], [], []>} : vector<128x128xf32>, vector<128x128xf32>, vector<128x128xf32> -> vector<128x128xf32>
    %6 = vector.broadcast %3 : vector<1x128xf32> to vector<128x128xf32>
    %7 = arith.addf %5, %6 : vector<128x128xf32>
    %cst_8 = arith.constant 0.000000e+00 : f32
    %8 = vector.broadcast %cst_8 : f32 to vector<128x128xf32>
    %9 = arith.maximumf %7, %8 : vector<128x128xf32>
    %c0_9 = arith.constant 0 : index
    %c0_10 = arith.constant 0 : index
    %10 = vector.load %arg4[%c0_9, %c0_10] : memref<128x128xf32, #tpu.memory_space<vmem>>, vector<128x128xf32>
    %c0_11 = arith.constant 0 : index
    %c0_12 = arith.constant 0 : index
    %11 = vector.load %arg5[%c0_11, %c0_12] : memref<1x128xf32, #tpu.memory_space<vmem>>, vector<1x128xf32>
    %cst_13 = arith.constant dense<0.000000e+00> : vector<128x128xf32>
    %12 = tpu.matmul %9, %10, %cst_13 {dimension_numbers = #tpu.dot_dimension_numbers<[1], [0], [0], [1], [0, 0, 1, 1], [], []>} : vector<128x128xf32>, vector<128x128xf32>, vector<128x128xf32> -> vector<128x128xf32>
    %cst_14 = arith.constant dense<0.000000e+00> : vector<128x128xf32>
    %13 = tpu.matmul %1, %12, %cst_14 {dimension_numbers = #tpu.dot_dimension_numbers<[1], [0], [0], [1], [0, 0, 1, 1], [], []>} : vector<128x128xf32>, vector<128x128xf32>, vector<128x128xf32> -> vector<128x128xf32>
    %14 = vector.broadcast %11 : vector<1x128xf32> to vector<128x128xf32>
    %15 = arith.addf %13, %14 : vector<128x128xf32>
    %cst_15 = arith.constant 0.000000e+00 : f32
    %16 = vector.broadcast %cst_15 : f32 to vector<128x128xf32>
    %17 = arith.maximumf %15, %16 : vector<128x128xf32>
    %c0_16 = arith.constant 0 : index
    %c0_17 = arith.constant 0 : index
    %18 = vector.load %arg6[%c0_16, %c0_17] : memref<128x128xf32, #tpu.memory_space<vmem>>, vector<128x128xf32>
    %c0_18 = arith.constant 0 : index
    %c0_19 = arith.constant 0 : index
    %19 = vector.load %arg7[%c0_18, %c0_19] : memref<1x128xf32, #tpu.memory_space<vmem>>, vector<1x128xf32>
    %cst_20 = arith.constant dense<0.000000e+00> : vector<128x128xf32>
    %20 = tpu.matmul %17, %18, %cst_20 {dimension_numbers = #tpu.dot_dimension_numbers<[1], [0], [0], [1], [0, 0, 1, 1], [], []>} : vector<128x128xf32>, vector<128x128xf32>, vector<128x128xf32> -> vector<128x128xf32>
    %21 = vector.broadcast %19 : vector<1x128xf32> to vector<128x128xf32>
    %22 = arith.addf %20, %21 : vector<128x128xf32>
    %23 = tpu.iota {dimensions = array<i32: 1>} : vector<128x128xi32>
    %c8_i32 = arith.constant 8 : i32
    %24 = vector.broadcast %c8_i32 : i32 to vector<128x128xi32>
    %25 = arith.cmpi slt, %23, %24 : vector<128x128xi32>
    %cst_21 = arith.constant -1.000000e+30 : f32
    %26 = vector.broadcast %cst_21 : f32 to vector<128x128xf32>
    %27 = arith.select %25, %22, %26 : vector<128x128xi1>, vector<128x128xf32>
    %cst_22 = arith.constant dense<0xFF800000> : vector<128xf32>
    %28 = vector.multi_reduction <maximumf>, %27, %cst_22 [1] : vector<128x128xf32> to vector<128xf32>
    %29 = vector.shape_cast %28 : vector<128xf32> to vector<128x1xf32>
    %30 = vector.broadcast %29 : vector<128x1xf32> to vector<128x128xf32>
    %31 = arith.subf %27, %30 : vector<128x128xf32>
    %32 = math.exp %31 : vector<128x128xf32>
    %cst_23 = arith.constant dense<0.000000e+00> : vector<128xf32>
    %33 = vector.multi_reduction <add>, %32, %cst_23 [1] : vector<128x128xf32> to vector<128xf32>
    %34 = vector.shape_cast %33 : vector<128xf32> to vector<128x1xf32>
    %35 = math.log %34 : vector<128x1xf32>
    %36 = vector.broadcast %35 : vector<128x1xf32> to vector<128x128xf32>
    %37 = arith.subf %31, %36 : vector<128x128xf32>
    %c0_24 = arith.constant 0 : index
    %c0_25 = arith.constant 0 : index
    %38 = vector.load %arg8[%c0_24, %c0_25] : memref<128x128xf32, #tpu.memory_space<vmem>>, vector<128x128xf32>
    tpu.vector_store %arg8[%c0_24, %c0_25], %37 {strides = array<i32>} : memref<128x128xf32, #tpu.memory_space<vmem>>, vector<128x128xf32>,
    return
  }
}

</mosaic_0001>

<llo_original>
// kernel: tpu_custom_call.1
$region0: #{tpu_custom_call.1}
  #allocation0 [shape = 'u32[]', space=smem, size = 0x4, offset = 0x4, fixed_abs, tag = 'smem constant byte address 0x4 - core index']
  #allocation1 [shape = 'u32[144,128]{1,0:T(1,128)}', space=vmem, size = 0x12000, scoped, tag = 'internal scratch']
  %s0 = inlined_call_operand.hbm [shape: f32[128,128], index: 0, kind: input, shape index: {}]
  %s1 = inlined_call_operand.hbm [shape: f32[128,128], index: 1, kind: input, shape index: {}]
  %s2 = inlined_call_operand.hbm [shape: f32[128,128], index: 2, kind: input, shape index: {}]
  %s3 = inlined_call_operand.hbm [shape: f32[1,128], index: 3, kind: input, shape index: {}]
  %s4 = inlined_call_operand.hbm [shape: f32[128,128], index: 4, kind: input, shape index: {}]
  %s5 = inlined_call_operand.hbm [shape: f32[1,128], index: 5, kind: input, shape index: {}]
  %s6 = inlined_call_operand.hbm [shape: f32[128,128], index: 6, kind: input, shape index: {}]
  %s7 = inlined_call_operand.hbm [shape: f32[1,128], index: 7, kind: input, shape index: {}]
  %s8 = inlined_call_operand.hbm [shape: f32[128,128], index: 8, kind: output, shape index: {}]
  %s9 = sld [smem:[#allocation0]]
  $region74: #{tpu_custom_call.1} parent=0
    _
  %s11 = ssub.s32 1, %s9
  %s12 = scalar_select 0, %s11, %s9
  $region1: #{tpu_custom_call.1} parent=0
    #allocation2 [shape = 'u8[65536]{0}', space=vmem, size = 0x10000, scoped, tag = 'input window, operand 0, single buffered']
    #allocation3 [shape = 's32[1]{0}', space=sflag, size = 0x4, scoped, tag = 'scoped memory for tpu_custom_call.1']
    #allocation4 [shape = 's32[1]{0}', space=sflag, size = 0x4, scoped, tag = 'scoped memory for tpu_custom_call.1']
    #allocation5 [shape = 'u8[65536]{0}', space=vmem, size = 0x10000, scoped, tag = 'input window, operand 1, single buffered']
    #allocation6 [shape = 's32[1]{0}', space=sflag, size = 0x4, scoped, tag = 'scoped memory for tpu_custom_call.1']
    #allocation7 [shape = 'u8[65536]{0}', space=vmem, size = 0x10000, scoped, tag = 'input window, operand 2, single buffered']
    #allocation8 [shape = 'u8[512]{0}', space=vmem, size = 0x400, scoped, tag = 'input window, operand 3, single buffered']
    #allocation9 [shape = 's32[1]{0}', space=sflag, size = 0x4, scoped, tag = 'scoped memory for tpu_custom_call.1']
    #allocation10 [shape = 'u8[65536]{0}', space=vmem, size = 0x10000, scoped, tag = 'input window, operand 4, single buffered']
    #allocation11 [shape = 'u8[512]{0}', space=vmem, size = 0x400, scoped, tag = 'input window, operand 5, single buffered']
    #allocation12 [shape = 's32[1]{0}', space=sflag, size = 0x4, scoped, tag = 'scoped memory for tpu_custom_call.1']
    #allocation13 [shape = 'u8[65536]{0}', space=vmem, size = 0x10000, scoped, tag = 'input window, operand 6, single buffered']
    #allocation14 [shape = 'u8[512]{0}', space=vmem, size = 0x400, scoped, tag = 'input window, operand 7, single buffered']
    #allocation15 [shape = 's32[1]{0}', space=sflag, size = 0x4, scoped, tag = 'scoped memory for tpu_custom_call.1']
    #allocation16 [shape = 'u8[65536]{0}', space=vmem, size = 0x10000, scoped, tag = 'output window, operand 0, single buffered']
    %13 = vsyncpa [#allocation3], 0
    %14 = vsyncpa [#allocation6], 0
    %15 = vsyncpa [#allocation9], 0
    %16 = vsyncpa [#allocation12], 0
    %17 = vsyncpa [#allocation15], 0
    %18 = vsyncpa [#allocation4], 0
    // Predicated region
    $region2: #{tpu_custom_call.1} parent=1 // pred_check
      _
    $region3: #{tpu_custom_call.1} parent=1 // pred_check_branch
      %20 = sbr.rel (0) target = $region5
    $region4: #{tpu_custom_call.1} parent=1 // pred_region
      %s22 = ssub.s32 2048, 2048
      %23 = vsyncadd [#allocation3], %s22
      %s24 = sshll.u32 [#allocation2], 4
      %s25 = int_to_ptr.vmem [resolvable:$true] %s24
      %30 = dma.hbm_to_vmem [thread:$0]  %s0, 2048, %s25, [#allocation3], 128, 128, 8
    $region5: #{tpu_custom_call.1} parent=1 // pred_fallthru
      _
    // Predicated region
    $region6: #{tpu_custom_call.1} parent=1 // pred_check
      _
    $region7: #{tpu_custom_call.1} parent=1 // pred_check_branch
      %32 = sbr.rel (0) target = $region9
    $region8: #{tpu_custom_call.1} parent=1 // pred_region
      %s34 = ssub.s32 2048, 2048
      %35 = vsyncadd [#allocation6], %s34
      %s36 = sshll.u32 [#allocation5], 4
      %s37 = int_to_ptr.vmem [resolvable:$true] %s36
      %42 = dma.hbm_to_vmem [thread:$0]  %s1, 2048, %s37, [#allocation6], 128, 128, 8
    $region9: #{tpu_custom_call.1} parent=1 // pred_fallthru
      _
    // Predicated region
    $region10: #{tpu_custom_call.1} parent=1 // pred_check
      _
    $region11: #{tpu_custom_call.1} parent=1 // pred_check_branch
      %44 = sbr.rel (0) target = $region13
    $region12: #{tpu_custom_call.1} parent=1 // pred_region
      %s46 = ssub.s32 2048, 2048
      %47 = vsyncadd [#allocation6], %s46
      %s48 = sshll.u32 [#allocation7], 4
      %s49 = int_to_ptr.vmem [resolvable:$true] %s48
      %54 = dma.hbm_to_vmem [thread:$0]  %s2, 2048, %s49, [#allocation6], 128, 128, 8
    $region13: #{tpu_custom_call.1} parent=1 // pred_fallthru
      _
    // Predicated region
    $region14: #{tpu_custom_call.1} parent=1 // pred_check
      _
    $region15: #{tpu_custom_call.1} parent=1 // pred_check_branch
      %56 = sbr.rel (0) target = $region17
    $region16: #{tpu_custom_call.1} parent=1 // pred_region
      %s58 = ssub.s32 16, 16
      %59 = vsyncadd [#allocation9], %s58
      %s61 = sshll.u32 [#allocation8], 4
      %s62 = int_to_ptr.vmem [resolvable:$true] %s61
      %64 = dma.hbm_to_vmem [thread:$0]  %s3, 16, %s62, [#allocation9]
    $region17: #{tpu_custom_call.1} parent=1 // pred_fallthru
      _
    // Predicated region
    $region18: #{tpu_custom_call.1} parent=1 // pred_check
      _
    $region19: #{tpu_custom_call.1} parent=1 // pred_check_branch
      %66 = sbr.rel (0) target = $region21
    $region20: #{tpu_custom_call.1} parent=1 // pred_region
      %s68 = ssub.s32 2048, 2048
      %69 = vsyncadd [#allocation9], %s68
      %s70 = sshll.u32 [#allocation10], 4
      %s71 = int_to_ptr.vmem [resolvable:$true] %s70
      %76 = dma.hbm_to_vmem [thread:$0]  %s4, 2048, %s71, [#allocation9], 128, 128, 8
    $region21: #{tpu_custom_call.1} parent=1 // pred_fallthru
      _
    // Predicated region
    $region22: #{tpu_custom_call.1} parent=1 // pred_check
      _
    $region23: #{tpu_custom_call.1} parent=1 // pred_check_branch
      %78 = sbr.rel (0) target = $region25
    $region24: #{tpu_custom_call.1} parent=1 // pred_region
      %s80 = ssub.s32 16, 16
      %81 = vsyncadd [#allocation12], %s80
      %s83 = sshll.u32 [#allocation11], 4
      %s84 = int_to_ptr.vmem [resolvable:$true] %s83
      %86 = dma.hbm_to_vmem [thread:$0]  %s5, 16, %s84, [#allocation12]
    $region25: #{tpu_custom_call.1} parent=1 // pred_fallthru
      _
    // Predicated region
    $region26: #{tpu_custom_call.1} parent=1 // pred_check
      _
    $region27: #{tpu_custom_call.1} parent=1 // pred_check_branch
      %88 = sbr.rel (0) target = $region29
    $region28: #{tpu_custom_call.1} parent=1 // pred_region
      %s90 = ssub.s32 2048, 2048
      %91 = vsyncadd [#allocation12], %s90
      %s92 = sshll.u32 [#allocation13], 4
      %s93 = int_to_ptr.vmem [resolvable:$true] %s92
      %98 = dma.hbm_to_vmem [thread:$0]  %s6, 2048, %s93, [#allocation12], 128, 128, 8
    $region29: #{tpu_custom_call.1} parent=1 // pred_fallthru
      _
    // Predicated region
    $region30: #{tpu_custom_call.1} parent=1 // pred_check
      _
    $region31: #{tpu_custom_call.1} parent=1 // pred_check_branch
      %100 = sbr.rel (0) target = $region33
    $region32: #{tpu_custom_call.1} parent=1 // pred_region
      %s102 = ssub.s32 16, 16
      %103 = vsyncadd [#allocation15], %s102
      %s105 = sshll.u32 [#allocation14], 4
      %s106 = int_to_ptr.vmem [resolvable:$true] %s105
      %108 = dma.hbm_to_vmem [thread:$0]  %s7, 16, %s106, [#allocation15]
    $region33: #{tpu_custom_call.1} parent=1 // pred_fallthru
      _
    // Predicated region
    $region34: #{tpu_custom_call.1} parent=1 // pred_check
      _
    $region35: #{tpu_custom_call.1} parent=1 // pred_check_branch
      %110 = sbr.rel (0) target = $region37
    $region36: #{tpu_custom_call.1} parent=1 // pred_region
      %111 = dma.done [#allocation3], 2048
    $region37: #{tpu_custom_call.1} parent=1 // pred_fallthru
      _
    // Predicated region
    $region38: #{tpu_custom_call.1} parent=1 // pred_check
      _
    $region39: #{tpu_custom_call.1} parent=1 // pred_check_branch
      %113 = sbr.rel (0) target = $region41
    $region40: #{tpu_custom_call.1} parent=1 // pred_region
      %114 = dma.done [#allocation6], 2048
    $region41: #{tpu_custom_call.1} parent=1 // pred_fallthru
      _
    // Predicated region
    $region42: #{tpu_custom_call.1} parent=1 // pred_check
      _
    $region43: #{tpu_custom_call.1} parent=1 // pred_check_branch
      %116 = sbr.rel (0) target = $region45
    $region44: #{tpu_custom_call.1} parent=1 // pred_region
      %117 = dma.done [#allocation6], 2048
    $region45: #{tpu_custom_call.1} parent=1 // pred_fallthru
      _
    // Predicated region
    $region46: #{tpu_custom_call.1} parent=1 // pred_check
      _
    $region47: #{tpu_custom_call.1} parent=1 // pred_check_branch
      %119 = sbr.rel (0) target = $region49
    $region48: #{tpu_custom_call.1} parent=1 // pred_region
      %120 = dma.done [#allocation9], 16
    $region49: #{tpu_custom_call.1} parent=1 // pred_fallthru
      _
    // Predicated region
    $region50: #{tpu_custom_call.1} parent=1 // pred_check
      _
    $region51: #{tpu_custom_call.1} parent=1 // pred_check_branch
      %122 = sbr.rel (0) target = $region53
    $region52: #{tpu_custom_call.1} parent=1 // pred_region
      %123 = dma.done [#allocation9], 2048
    $region53: #{tpu_custom_call.1} parent=1 // pred_fallthru
      _
    // Predicated region
    $region54: #{tpu_custom_call.1} parent=1 // pred_check
      _
    $region55: #{tpu_custom_call.1} parent=1 // pred_check_branch
      %125 = sbr.rel (0) target = $region57
    $region56: #{tpu_custom_call.1} parent=1 // pred_region
      %126 = dma.done [#allocation12], 16
    $region57: #{tpu_custom_call.1} parent=1 // pred_fallthru
      _
    // Predicated region
    $region58: #{tpu_custom_call.1} parent=1 // pred_check
      _
    $region59: #{tpu_custom_call.1} parent=1 // pred_check_branch
      %128 = sbr.rel (0) target = $region61
    $region60: #{tpu_custom_call.1} parent=1 // pred_region
      %129 = dma.done [#allocation12], 2048
    $region61: #{tpu_custom_call.1} parent=1 // pred_fallthru
      _
    // Predicated region
    $region62: #{tpu_custom_call.1} parent=1 // pred_check
      _
    $region63: #{tpu_custom_call.1} parent=1 // pred_check_branch
      %131 = sbr.rel (0) target = $region65
    $region64: #{tpu_custom_call.1} parent=1 // pred_region
      %132 = dma.done [#allocation15], 16
    $region65: #{tpu_custom_call.1} parent=1 // pred_fallthru
      _
    %v133 = vld [vmem:[#allocation2] sm:$0xff]
    %v134 = vld [vmem:[#allocation2 + $0x8] sm:$0xff]
    %v135 = vld [vmem:[#allocation2 + $0x10] sm:$0xff]
    %v136 = vld [vmem:[#allocation2 + $0x18] sm:$0xff]
    %v137 = vld [vmem:[#allocation2 + $0x20] sm:$0xff]
    %v138 = vld [vmem:[#allocation2 + $0x28] sm:$0xff]
    %v139 = vld [vmem:[#allocation2 + $0x30] sm:$0xff]
    %v140 = vld [vmem:[#allocation2 + $0x38] sm:$0xff]
    %v141 = vld [vmem:[#allocation2 + $0x40] sm:$0xff]
    %v142 = vld [vmem:[#allocation2 + $0x48] sm:$0xff]
    %v143 = vld [vmem:[#allocation2 + $0x50] sm:$0xff]
    %v144 = vld [vmem:[#allocation2 + $0x58] sm:$0xff]
    %v145 = vld [vmem:[#allocation2 + $0x60] sm:$0xff]
    %v146 = vld [vmem:[#allocation2 + $0x68] sm:$0xff]
    %v147 = vld [vmem:[#allocation2 + $0x70] sm:$0xff]
    %v148 = vld [vmem:[#allocation2 + $0x78] sm:$0xff]
    %v149 = vld [vmem:[#allocation5] sm:$0xff]
    %v150 = vld [vmem:[#allocation5 + $0x8] sm:$0xff]
    %v151 = vld [vmem:[#allocation5 + $0x10] sm:$0xff]
    %v152 = vld [vmem:[#allocation5 + $0x18] sm:$0xff]
    %v153 = vld [vmem:[#allocation5 + $0x20] sm:$0xff]
    %v154 = vld [vmem:[#allocation5 + $0x28] sm:$0xff]
    %v155 = vld [vmem:[#allocation5 + $0x30] sm:$0xff]
    %v156 = vld [vmem:[#allocation5 + $0x38] sm:$0xff]
    %v157 = vld [vmem:[#allocation5 + $0x40] sm:$0xff]
    %v158 = vld [vmem:[#allocation5 + $0x48] sm:$0xff]
    %v159 = vld [vmem:[#allocation5 + $0x50] sm:$0xff]
    %v160 = vld [vmem:[#allocation5 + $0x58] sm:$0xff]
    %v161 = vld [vmem:[#allocation5 + $0x60] sm:$0xff]
    %v162 = vld [vmem:[#allocation5 + $0x68] sm:$0xff]
    %v163 = vld [vmem:[#allocation5 + $0x70] sm:$0xff]
    %v164 = vld [vmem:[#allocation5 + $0x78] sm:$0xff]
    %v165 = vld [vmem:[#allocation7] sm:$0xff]
    %v166 = vld [vmem:[#allocation7 + $0x8] sm:$0xff]
    %v167 = vld [vmem:[#allocation7 + $0x10] sm:$0xff]
    %v168 = vld [vmem:[#allocation7 + $0x18] sm:$0xff]
    %v169 = vld [vmem:[#allocation7 + $0x20] sm:$0xff]
    %v170 = vld [vmem:[#allocation7 + $0x28] sm:$0xff]
    %v171 = vld [vmem:[#allocation7 + $0x30] sm:$0xff]
    %v172 = vld [vmem:[#allocation7 + $0x38] sm:$0xff]
    %v173 = vld [vmem:[#allocation7 + $0x40] sm:$0xff]
    %v174 = vld [vmem:[#allocation7 + $0x48] sm:$0xff]
    %v175 = vld [vmem:[#allocation7 + $0x50] sm:$0xff]
    %v176 = vld [vmem:[#allocation7 + $0x58] sm:$0xff]
    %v177 = vld [vmem:[#allocation7 + $0x60] sm:$0xff]
    %v178 = vld [vmem:[#allocation7 + $0x68] sm:$0xff]
    %v179 = vld [vmem:[#allocation7 + $0x70] sm:$0xff]
    %v180 = vld [vmem:[#allocation7 + $0x78] sm:$0xff]
    %v181 = vld [vmem:[#allocation8] sm:$0x1]
    %182 = vmatprep.subr.mxu0 0.0
    %183 = vmatpush1.msra.mxu0 %v165
    %184 = vmatprep.subr.mxu0 0.0
    %185 = vmatpush1.msra.mxu0 %v166
    %186 = vmatprep.subr.mxu0 0.0
    %187 = vmatpush1.msra.mxu0 %v167
    %188 = vmatprep.subr.mxu0 0.0
    %189 = vmatpush1.msra.mxu0 %v168
    %190 = vmatprep.subr.mxu0 0.0
    %191 = vmatpush1.msra.mxu0 %v169
    %192 = vmatprep.subr.mxu0 0.0
    %193 = vmatpush1.msra.mxu0 %v170
    %194 = vmatprep.subr.mxu0 0.0
    %195 = vmatpush1.msra.mxu0 %v171
    %196 = vmatprep.subr.mxu0 0.0
    %197 = vmatpush1.msra.mxu0 %v172
    %198 = vmatprep.subr.mxu0 0.0
    %199 = vmatpush1.msra.mxu0 %v173
    %200 = vmatprep.subr.mxu0 0.0
    %201 = vmatpush1.msra.mxu0 %v174
    %202 = vmatprep.subr.mxu0 0.0
    %203 = vmatpush1.msra.mxu0 %v175
    %204 = vmatprep.subr.mxu0 0.0
    %205 = vmatpush1.msra.mxu0 %v176
    %206 = vmatprep.subr.mxu0 0.0
    %207 = vmatpush1.msra.mxu0 %v177
    %208 = vmatprep.subr.mxu0 0.0
    %209 = vmatpush1.msra.mxu0 %v178
    %210 = vmatprep.subr.mxu0 0.0
    %211 = vmatpush1.msra.mxu0 %v179
    %212 = vmatprep.subr.mxu0 0.0
    %213 = vmatpush1.msra.mxu0 %v180
    %214 = vmatprep.subr.mxu0 0.0
    %215 = vmatpush1.msra.mxu0 0.0
    %216 = vmatprep.subr.mxu0 0.0
    %217 = vmatpush1.msra.mxu0 0.0
    %218 = vmatprep.subr.mxu0 0.0
    %219 = vmatpush1.msra.mxu0 0.0
    %220 = vmatprep.subr.mxu0 0.0
    %221 = vmatpush1.msra.mxu0 0.0
    %222 = vmatprep.subr.mxu0 0.0
    %223 = vmatpush1.msra.mxu0 0.0
    %224 = vmatprep.subr.mxu0 0.0
    %225 = vmatpush1.msra.mxu0 0.0
    %226 = vmatprep.subr.mxu0 0.0
    %227 = vmatpush1.msra.mxu0 0.0
    %228 = vmatprep.subr.mxu0 0.0
    %229 = vmatpush1.msra.mxu0 0.0
    %230 = vmatprep.subr.mxu0 0.0
    %231 = vmatpush1.msra.mxu0 0.0
    %232 = vmatprep.subr.mxu0 0.0
    %233 = vmatpush1.msra.mxu0 0.0
    %234 = vmatprep.subr.mxu0 0.0
    %235 = vmatpush1.msra.mxu0 0.0
    %236 = vmatprep.subr.mxu0 0.0
    %237 = vmatpush1.msra.mxu0 0.0
    %238 = vmatprep.subr.mxu0 0.0
    %239 = vmatpush1.msra.mxu0 0.0
    %240 = vmatprep.subr.mxu0 0.0
    %241 = vmatpush1.msra.mxu0 0.0
    %242 = vmatprep.subr.mxu0 0.0
    %243 = vmatpush1.msra.mxu0 0.0
    %244 = vmatprep.subr.mxu0 0.0
    %245 = vmatpush1.msra.mxu0 0.0
    %246 = vmatprep.mubr.f32.mxu0 0.0
    %247 = vmatmul.mubr.f32.gmra.mrb[0].mxu0 %v133
    %v248 = vpop.f32.mrb[0].mxu0
    %v249 = vadd.f32 0.0, %v248
    %v250 = vpop.f32.mrb[0].mxu0
    %251 = vmatprep.mubr.f32.mxu0 0.0
    %252 = vmatmul.mubr.f32.gmra.mrb[0].mxu0 %v134
    %v253 = vpop.f32.mrb[0].mxu0
    %v254 = vadd.f32 0.0, %v253
    %v255 = vpop.f32.mrb[0].mxu0
    %256 = vmatprep.mubr.f32.mxu0 0.0
    %257 = vmatmul.mubr.f32.gmra.mrb[0].mxu0 %v135
    %v258 = vpop.f32.mrb[0].mxu0
    %v259 = vadd.f32 0.0, %v258
    %v260 = vpop.f32.mrb[0].mxu0
    %261 = vmatprep.mubr.f32.mxu0 0.0
    %262 = vmatmul.mubr.f32.gmra.mrb[0].mxu0 %v136
    %v263 = vpop.f32.mrb[0].mxu0
    %v264 = vadd.f32 0.0, %v263
    %v265 = vpop.f32.mrb[0].mxu0
    %266 = vmatprep.mubr.f32.mxu0 0.0
    %267 = vmatmul.mubr.f32.gmra.mrb[0].mxu0 %v137
    %v268 = vpop.f32.mrb[0].mxu0
    %v269 = vadd.f32 0.0, %v268
    %v270 = vpop.f32.mrb[0].mxu0
    %271 = vmatprep.mubr.f32.mxu0 0.0
    %272 = vmatmul.mubr.f32.gmra.mrb[0].mxu0 %v138
    %v273 = vpop.f32.mrb[0].mxu0
    %v274 = vadd.f32 0.0, %v273
    %v275 = vpop.f32.mrb[0].mxu0
    %276 = vmatprep.mubr.f32.mxu0 0.0
    %277 = vmatmul.mubr.f32.gmra.mrb[0].mxu0 %v139
    %v278 = vpop.f32.mrb[0].mxu0
    %v279 = vadd.f32 0.0, %v278
    %v280 = vpop.f32.mrb[0].mxu0
    %281 = vmatprep.mubr.f32.mxu0 0.0
    %282 = vmatmul.mubr.f32.gmra.mrb[0].mxu0 %v140
    %v283 = vpop.f32.mrb[0].mxu0
    %v284 = vadd.f32 0.0, %v283
    %v285 = vpop.f32.mrb[0].mxu0
    %286 = vmatprep.mubr.f32.mxu0 0.0
    %287 = vmatmul.mubr.f32.gmra.mrb[0].mxu0 %v141
    %v288 = vpop.f32.mrb[0].mxu0
    %v289 = vadd.f32 0.0, %v288
    %v290 = vpop.f32.mrb[0].mxu0
    %291 = vmatprep.mubr.f32.mxu0 0.0
    %292 = vmatmul.mubr.f32.gmra.mrb[0].mxu0 %v142
    %v293 = vpop.f32.mrb[0].mxu0
    %v294 = vadd.f32 0.0, %v293
    %v295 = vpop.f32.mrb[0].mxu0
    %296 = vmatprep.mubr.f32.mxu0 0.0
    %297 = vmatmul.mubr.f32.gmra.mrb[0].mxu0 %v143
    %v298 = vpop.f32.mrb[0].mxu0
    %v299 = vadd.f32 0.0, %v298
    %v300 = vpop.f32.mrb[0].mxu0
    %301 = vmatprep.mubr.f32.mxu0 0.0
    %302 = vmatmul.mubr.f32.gmra.mrb[0].mxu0 %v144
    %v303 = vpop.f32.mrb[0].mxu0
    %v304 = vadd.f32 0.0, %v303
    %v305 = vpop.f32.mrb[0].mxu0
    %306 = vmatprep.mubr.f32.mxu0 0.0
    %307 = vmatmul.mubr.f32.gmra.mrb[0].mxu0 %v145
    %v308 = vpop.f32.mrb[0].mxu0
    %v309 = vadd.f32 0.0, %v308
    %v310 = vpop.f32.mrb[0].mxu0
    %311 = vmatprep.mubr.f32.mxu0 0.0
    %312 = vmatmul.mubr.f32.gmra.mrb[0].mxu0 %v146
    %v313 = vpop.f32.mrb[0].mxu0
    %v314 = vadd.f32 0.0, %v313
    %v315 = vpop.f32.mrb[0].mxu0
    %316 = vmatprep.mubr.f32.mxu0 0.0
    %317 = vmatmul.mubr.f32.gmra.mrb[0].mxu0 %v147
    %v318 = vpop.f32.mrb[0].mxu0
    %v319 = vadd.f32 0.0, %v318
    %v320 = vpop.f32.mrb[0].mxu0
    %321 = vmatprep.mubr.f32.mxu0 0.0
    %322 = vmatmul.mubr.f32.gmra.mrb[0].mxu0 %v148
    %v323 = vpop.f32.mrb[0].mxu0
    %v324 = vadd.f32 0.0, %v323
    %v325 = vpop.f32.mrb[0].mxu0
    %326 = vdwg.mxu0
    %v328 = vlaneseq
    %v329 = vshrl.u32 %v328, 7
    %v330 = vsub.s32 0, %v329
    %v331 = vrot.slane %v181, %v330
    %333 = vmatprep.subr.mxu0 0.0
    %334 = vmatpush1.msra.mxu0 %v249
    %335 = vmatprep.subr.mxu0 0.0
    %336 = vmatpush1.msra.mxu0 %v254
    %337 = vmatprep.subr.mxu0 0.0
    %338 = vmatpush1.msra.mxu0 %v259
    %339 = vmatprep.subr.mxu0 0.0
    %340 = vmatpush1.msra.mxu0 %v264
    %341 = vmatprep.subr.mxu0 0.0
    %342 = vmatpush1.msra.mxu0 %v269
    %343 = vmatprep.subr.mxu0 0.0
    %344 = vmatpush1.msra.mxu0 %v274
    %345 = vmatprep.subr.mxu0 0.0
    %346 = vmatpush1.msra.mxu0 %v279
    %347 = vmatprep.subr.mxu0 0.0
    %348 = vmatpush1.msra.mxu0 %v284
    %349 = vmatprep.subr.mxu0 0.0
    %350 = vmatpush1.msra.mxu0 %v289
    %351 = vmatprep.subr.mxu0 0.0
    %352 = vmatpush1.msra.mxu0 %v294
    %353 = vmatprep.subr.mxu0 0.0
    %354 = vmatpush1.msra.mxu0 %v299
    %355 = vmatprep.subr.mxu0 0.0
    %356 = vmatpush1.msra.mxu0 %v304
    %357 = vmatprep.subr.mxu0 0.0
    %358 = vmatpush1.msra.mxu0 %v309
    %359 = vmatprep.subr.mxu0 0.0
    %360 = vmatpush1.msra.mxu0 %v314
    %361 = vmatprep.subr.mxu0 0.0
    %362 = vmatpush1.msra.mxu0 %v319
    %363 = vmatprep.subr.mxu0 0.0
    %364 = vmatpush1.msra.mxu0 %v324
    %365 = vmatprep.subr.mxu0 0.0
    %366 = vmatpush1.msra.mxu0 0.0
    %367 = vmatprep.subr.mxu0 0.0
    %368 = vmatpush1.msra.mxu0 0.0
    %369 = vmatprep.subr.mxu0 0.0
    %370 = vmatpush1.msra.mxu0 0.0
    %371 = vmatprep.subr.mxu0 0.0
    %372 = vmatpush1.msra.mxu0 0.0
    %373 = vmatprep.subr.mxu0 0.0
    %374 = vmatpush1.msra.mxu0 0.0
    %375 = vmatprep.subr.mxu0 0.0
    %376 = vmatpush1.msra.mxu0 0.0
    %377 = vmatprep.subr.mxu0 0.0
    %378 = vmatpush1.msra.mxu0 0.0
    %379 = vmatprep.subr.mxu0 0.0
    %380 = vmatpush1.msra.mxu0 0.0
    %381 = vmatprep.subr.mxu0 0.0
    %382 = vmatpush1.msra.mxu0 0.0
    %383 = vmatprep.subr.mxu0 0.0
    %384 = vmatpush1.msra.mxu0 0.0
    %385 = vmatprep.subr.mxu0 0.0
    %386 = vmatpush1.msra.mxu0 0.0
    %387 = vmatprep.subr.mxu0 0.0
    %388 = vmatpush1.msra.mxu0 0.0
    %389 = vmatprep.subr.mxu0 0.0
    %390 = vmatpush1.msra.mxu0 0.0
    %391 = vmatprep.subr.mxu0 0.0
    %392 = vmatpush1.msra.mxu0 0.0
    %393 = vmatprep.subr.mxu0 0.0
    %394 = vmatpush1.msra.mxu0 0.0
    %395 = vmatprep.subr.mxu0 0.0
    %396 = vmatpush1.msra.mxu0 0.0
    %397 = vmatprep.mubr.f32.mxu0 0.0
    %398 = vmatmul.mubr.f32.gmra.mrb[0].mxu0 %v149
    %v399 = vpop.f32.mrb[0].mxu0
    %v400 = vadd.f32 %v331, %v399
    %v401 = vpop.f32.mrb[0].mxu0
    %402 = vmatprep.mubr.f32.mxu0 0.0
    %403 = vmatmul.mubr.f32.gmra.mrb[0].mxu0 %v150
    %v404 = vpop.f32.mrb[0].mxu0
    %v405 = vadd.f32 %v331, %v404
    %v406 = vpop.f32.mrb[0].mxu0
    %407 = vmatprep.mubr.f32.mxu0 0.0
    %408 = vmatmul.mubr.f32.gmra.mrb[0].mxu0 %v151
    %v409 = vpop.f32.mrb[0].mxu0
    %v410 = vadd.f32 %v331, %v409
    %v411 = vpop.f32.mrb[0].mxu0
    %412 = vmatprep.mubr.f32.mxu0 0.0
    %413 = vmatmul.mubr.f32.gmra.mrb[0].mxu0 %v152
    %v414 = vpop.f32.mrb[0].mxu0
    %v415 = vadd.f32 %v331, %v414
    %v416 = vpop.f32.mrb[0].mxu0
    %417 = vmatprep.mubr.f32.mxu0 0.0
    %418 = vmatmul.mubr.f32.gmra.mrb[0].mxu0 %v153
    %v419 = vpop.f32.mrb[0].mxu0
    %v420 = vadd.f32 %v331, %v419
    %v421 = vpop.f32.mrb[0].mxu0
    %422 = vmatprep.mubr.f32.mxu0 0.0
    %423 = vmatmul.mubr.f32.gmra.mrb[0].mxu0 %v154
    %v424 = vpop.f32.mrb[0].mxu0
    %v425 = vadd.f32 %v331, %v424
    %v426 = vpop.f32.mrb[0].mxu0
    %427 = vmatprep.mubr.f32.mxu0 0.0
    %428 = vmatmul.mubr.f32.gmra.mrb[0].mxu0 %v155
    %v429 = vpop.f32.mrb[0].mxu0
    %v430 = vadd.f32 %v331, %v429
    %v431 = vpop.f32.mrb[0].mxu0
    %432 = vmatprep.mubr.f32.mxu0 0.0
    %433 = vmatmul.mubr.f32.gmra.mrb[0].mxu0 %v156
    %v434 = vpop.f32.mrb[0].mxu0
    %v435 = vadd.f32 %v331, %v434
    %v436 = vpop.f32.mrb[0].mxu0
    %437 = vmatprep.mubr.f32.mxu0 0.0
    %438 = vmatmul.mubr.f32.gmra.mrb[0].mxu0 %v157
    %v439 = vpop.f32.mrb[0].mxu0
    %v440 = vadd.f32 %v331, %v439
    %v441 = vpop.f32.mrb[0].mxu0
    %442 = vmatprep.mubr.f32.mxu0 0.0
    %443 = vmatmul.mubr.f32.gmra.mrb[0].mxu0 %v158
    %v444 = vpop.f32.mrb[0].mxu0
    %v445 = vadd.f32 %v331, %v444
    %v446 = vpop.f32.mrb[0].mxu0
    %447 = vmatprep.mubr.f32.mxu0 0.0
    %448 = vmatmul.mubr.f32.gmra.mrb[0].mxu0 %v159
    %v449 = vpop.f32.mrb[0].mxu0
    %v450 = vadd.f32 %v331, %v449
    %v451 = vpop.f32.mrb[0].mxu0
    %452 = vmatprep.mubr.f32.mxu0 0.0
    %453 = vmatmul.mubr.f32.gmra.mrb[0].mxu0 %v160
    %v454 = vpop.f32.mrb[0].mxu0
    %v455 = vadd.f32 %v331, %v454
    %v456 = vpop.f32.mrb[0].mxu0
    %457 = vmatprep.mubr.f32.mxu0 0.0
    %458 = vmatmul.mubr.f32.gmra.mrb[0].mxu0 %v161
    %v459 = vpop.f32.mrb[0].mxu0
    %v460 = vadd.f32 %v331, %v459
    %v461 = vpop.f32.mrb[0].mxu0
    %462 = vmatprep.mubr.f32.mxu0 0.0
    %463 = vmatmul.mubr.f32.gmra.mrb[0].mxu0 %v162
    %v464 = vpop.f32.mrb[0].mxu0
    %v465 = vadd.f32 %v331, %v464
    %v466 = vpop.f32.mrb[0].mxu0
    %467 = vmatprep.mubr.f32.mxu0 0.0
    %468 = vmatmul.mubr.f32.gmra.mrb[0].mxu0 %v163
    %v469 = vpop.f32.mrb[0].mxu0
    %v470 = vadd.f32 %v331, %v469
    %v471 = vpop.f32.mrb[0].mxu0
    %472 = vmatprep.mubr.f32.mxu0 0.0
    %473 = vmatmul.mubr.f32.gmra.mrb[0].mxu0 %v164
    %v474 = vpop.f32.mrb[0].mxu0
    %v475 = vadd.f32 %v331, %v474
    %v476 = vpop.f32.mrb[0].mxu0
    %477 = vdwg.mxu0
    %v478 = vmax.f32 %v400, 0.0
    %v479 = vmax.f32 %v405, 0.0
    %v480 = vmax.f32 %v410, 0.0
    %v481 = vmax.f32 %v415, 0.0
    %v482 = vmax.f32 %v420, 0.0
    %v483 = vmax.f32 %v425, 0.0
    %v484 = vmax.f32 %v430, 0.0
    %v485 = vmax.f32 %v435, 0.0
    %v486 = vmax.f32 %v440, 0.0
    %v487 = vmax.f32 %v445, 0.0
    %v488 = vmax.f32 %v450, 0.0
    %v489 = vmax.f32 %v455, 0.0
    %v490 = vmax.f32 %v460, 0.0
    %v491 = vmax.f32 %v465, 0.0
    %v492 = vmax.f32 %v470, 0.0
    %v493 = vmax.f32 %v475, 0.0
    %v494 = vld [vmem:[#allocation10] sm:$0xff]
    %v495 = vld [vmem:[#allocation10 + $0x8] sm:$0xff]
    %v496 = vld [vmem:[#allocation10 + $0x10] sm:$0xff]
    %v497 = vld [vmem:[#allocation10 + $0x18] sm:$0xff]
    %v498 = vld [vmem:[#allocation10 + $0x20] sm:$0xff]
    %v499 = vld [vmem:[#allocation10 + $0x28] sm:$0xff]
    %v500 = vld [vmem:[#allocation10 + $0x30] sm:$0xff]
    %v501 = vld [vmem:[#allocation10 + $0x38] sm:$0xff]
    %v502 = vld [vmem:[#allocation10 + $0x40] sm:$0xff]
    %v503 = vld [vmem:[#allocation10 + $0x48] sm:$0xff]
    %v504 = vld [vmem:[#allocation10 + $0x50] sm:$0xff]
    %v505 = vld [vmem:[#allocation10 + $0x58] sm:$0xff]
    %v506 = vld [vmem:[#allocation10 + $0x60] sm:$0xff]
    %v507 = vld [vmem:[#allocation10 + $0x68] sm:$0xff]
    %v508 = vld [vmem:[#allocation10 + $0x70] sm:$0xff]
    %v509 = vld [vmem:[#allocation10 + $0x78] sm:$0xff]
    %v510 = vld [vmem:[#allocation11] sm:$0x1]
    %511 = vmatprep.subr.mxu0 0.0
    %512 = vmatpush1.msra.mxu0 %v494
    %513 = vmatprep.subr.mxu0 0.0
    %514 = vmatpush1.msra.mxu0 %v495
    %515 = vmatprep.subr.mxu0 0.0
    %516 = vmatpush1.msra.mxu0 %v496
    %517 = vmatprep.subr.mxu0 0.0
    %518 = vmatpush1.msra.mxu0 %v497
    %519 = vmatprep.subr.mxu0 0.0
    %520 = vmatpush1.msra.mxu0 %v498
    %521 = vmatprep.subr.mxu0 0.0
    %522 = vmatpush1.msra.mxu0 %v499
    %523 = vmatprep.subr.mxu0 0.0
    %524 = vmatpush1.msra.mxu0 %v500
    %525 = vmatprep.subr.mxu0 0.0
    %526 = vmatpush1.msra.mxu0 %v501
    %527 = vmatprep.subr.mxu0 0.0
    %528 = vmatpush1.msra.mxu0 %v502
    %529 = vmatprep.subr.mxu0 0.0
    %530 = vmatpush1.msra.mxu0 %v503
    %531 = vmatprep.subr.mxu0 0.0
    %532 = vmatpush1.msra.mxu0 %v504
    %533 = vmatprep.subr.mxu0 0.0
    %534 = vmatpush1.msra.mxu0 %v505
    %535 = vmatprep.subr.mxu0 0.0
    %536 = vmatpush1.msra.mxu0 %v506
    %537 = vmatprep.subr.mxu0 0.0
    %538 = vmatpush1.msra.mxu0 %v507
    %539 = vmatprep.subr.mxu0 0.0
    %540 = vmatpush1.msra.mxu0 %v508
    %541 = vmatprep.subr.mxu0 0.0
    %542 = vmatpush1.msra.mxu0 %v509
    %543 = vmatprep.subr.mxu0 0.0
    %544 = vmatpush1.msra.mxu0 0.0
    %545 = vmatprep.subr.mxu0 0.0
    %546 = vmatpush1.msra.mxu0 0.0
    %547 = vmatprep.subr.mxu0 0.0
    %548 = vmatpush1.msra.mxu0 0.0
    %549 = vmatprep.subr.mxu0 0.0
    %550 = vmatpush1.msra.mxu0 0.0
    %551 = vmatprep.subr.mxu0 0.0
    %552 = vmatpush1.msra.mxu0 0.0
    %553 = vmatprep.subr.mxu0 0.0
    %554 = vmatpush1.msra.mxu0 0.0
    %555 = vmatprep.subr.mxu0 0.0
    %556 = vmatpush1.msra.mxu0 0.0
    %557 = vmatprep.subr.mxu0 0.0
    %558 = vmatpush1.msra.mxu0 0.0
    %559 = vmatprep.subr.mxu0 0.0
    %560 = vmatpush1.msra.mxu0 0.0
    %561 = vmatprep.subr.mxu0 0.0
    %562 = vmatpush1.msra.mxu0 0.0
    %563 = vmatprep.subr.mxu0 0.0
    %564 = vmatpush1.msra.mxu0 0.0
    %565 = vmatprep.subr.mxu0 0.0
    %566 = vmatpush1.msra.mxu0 0.0
    %567 = vmatprep.subr.mxu0 0.0
    %568 = vmatpush1.msra.mxu0 0.0
    %569 = vmatprep.subr.mxu0 0.0
    %570 = vmatpush1.msra.mxu0 0.0
    %571 = vmatprep.subr.mxu0 0.0
    %572 = vmatpush1.msra.mxu0 0.0
    %573 = vmatprep.subr.mxu0 0.0
    %574 = vmatpush1.msra.mxu0 0.0
    %575 = vmatprep.mubr.f32.mxu0 0.0
    %576 = vmatmul.mubr.f32.gmra.mrb[0].mxu0 %v478
    %v577 = vpop.f32.mrb[0].mxu0
    %v578 = vadd.f32 0.0, %v577
    %v579 = vpop.f32.mrb[0].mxu0
    %580 = vmatprep.mubr.f32.mxu0 0.0
    %581 = vmatmul.mubr.f32.gmra.mrb[0].mxu0 %v479
    %v582 = vpop.f32.mrb[0].mxu0
    %v583 = vadd.f32 0.0, %v582
    %v584 = vpop.f32.mrb[0].mxu0
    %585 = vmatprep.mubr.f32.mxu0 0.0
    %586 = vmatmul.mubr.f32.gmra.mrb[0].mxu0 %v480
    %v587 = vpop.f32.mrb[0].mxu0
    %v588 = vadd.f32 0.0, %v587
    %v589 = vpop.f32.mrb[0].mxu0
    %590 = vmatprep.mubr.f32.mxu0 0.0
    %591 = vmatmul.mubr.f32.gmra.mrb[0].mxu0 %v481
    %v592 = vpop.f32.mrb[0].mxu0
    %v593 = vadd.f32 0.0, %v592
    %v594 = vpop.f32.mrb[0].mxu0
    %595 = vmatprep.mubr.f32.mxu0 0.0
    %596 = vmatmul.mubr.f32.gmra.mrb[0].mxu0 %v482
    %v597 = vpop.f32.mrb[0].mxu0
    %v598 = vadd.f32 0.0, %v597
    %v599 = vpop.f32.mrb[0].mxu0
    %600 = vmatprep.mubr.f32.mxu0 0.0
    %601 = vmatmul.mubr.f32.gmra.mrb[0].mxu0 %v483
    %v602 = vpop.f32.mrb[0].mxu0
    %v603 = vadd.f32 0.0, %v602
    %v604 = vpop.f32.mrb[0].mxu0
    %605 = vmatprep.mubr.f32.mxu0 0.0
    %606 = vmatmul.mubr.f32.gmra.mrb[0].mxu0 %v484
    %v607 = vpop.f32.mrb[0].mxu0
    %v608 = vadd.f32 0.0, %v607
    %v609 = vpop.f32.mrb[0].mxu0
    %610 = vmatprep.mubr.f32.mxu0 0.0
    %611 = vmatmul.mubr.f32.gmra.mrb[0].mxu0 %v485
    %v612 = vpop.f32.mrb[0].mxu0
    %v613 = vadd.f32 0.0, %v612
    %v614 = vpop.f32.mrb[0].mxu0
    %615 = vmatprep.mubr.f32.mxu0 0.0
    %616 = vmatmul.mubr.f32.gmra.mrb[0].mxu0 %v486
    %v617 = vpop.f32.mrb[0].mxu0
    %v618 = vadd.f32 0.0, %v617
    %v619 = vpop.f32.mrb[0].mxu0
    %620 = vmatprep.mubr.f32.mxu0 0.0
    %621 = vmatmul.mubr.f32.gmra.mrb[0].mxu0 %v487
    %v622 = vpop.f32.mrb[0].mxu0
    %v623 = vadd.f32 0.0, %v622
    %v624 = vpop.f32.mrb[0].mxu0
    %625 = vmatprep.mubr.f32.mxu0 0.0
    %626 = vmatmul.mubr.f32.gmra.mrb[0].mxu0 %v488
    %v627 = vpop.f32.mrb[0].mxu0
    %v628 = vadd.f32 0.0, %v627
    %v629 = vpop.f32.mrb[0].mxu0
    %630 = vmatprep.mubr.f32.mxu0 0.0
    %631 = vmatmul.mubr.f32.gmra.mrb[0].mxu0 %v489
    %v632 = vpop.f32.mrb[0].mxu0
    %v633 = vadd.f32 0.0, %v632
    %v634 = vpop.f32.mrb[0].mxu0
    %635 = vmatprep.mubr.f32.mxu0 0.0
    %636 = vmatmul.mubr.f32.gmra.mrb[0].mxu0 %v490
    %v637 = vpop.f32.mrb[0].mxu0
    %v638 = vadd.f32 0.0, %v637
    %v639 = vpop.f32.mrb[0].mxu0
    %640 = vmatprep.mubr.f32.mxu0 0.0
    %641 = vmatmul.mubr.f32.gmra.mrb[0].mxu0 %v491
    %v642 = vpop.f32.mrb[0].mxu0
    %v643 = vadd.f32 0.0, %v642
    %v644 = vpop.f32.mrb[0].mxu0
    %645 = vmatprep.mubr.f32.mxu0 0.0
    %646 = vmatmul.mubr.f32.gmra.mrb[0].mxu0 %v492
    %v647 = vpop.f32.mrb[0].mxu0
    %v648 = vadd.f32 0.0, %v647
    %v649 = vpop.f32.mrb[0].mxu0
    %650 = vmatprep.mubr.f32.mxu0 0.0
    %651 = vmatmul.mubr.f32.gmra.mrb[0].mxu0 %v493
    %v652 = vpop.f32.mrb[0].mxu0
    %v653 = vadd.f32 0.0, %v652
    %v654 = vpop.f32.mrb[0].mxu0
    %655 = vdwg.mxu0
    %v657 = vlaneseq
    %v658 = vshrl.u32 %v657, 7
    %v659 = vsub.s32 0, %v658
    %v660 = vrot.slane %v510, %v659
    %662 = vmatprep.subr.mxu0 0.0
    %663 = vmatpush1.msra.mxu0 %v578
    %664 = vmatprep.subr.mxu0 0.0
    %665 = vmatpush1.msra.mxu0 %v583
    %666 = vmatprep.subr.mxu0 0.0
    %667 = vmatpush1.msra.mxu0 %v588
    %668 = vmatprep.subr.mxu0 0.0
    %669 = vmatpush1.msra.mxu0 %v593
    %670 = vmatprep.subr.mxu0 0.0
    %671 = vmatpush1.msra.mxu0 %v598
    %672 = vmatprep.subr.mxu0 0.0
    %673 = vmatpush1.msra.mxu0 %v603
    %674 = vmatprep.subr.mxu0 0.0
    %675 = vmatpush1.msra.mxu0 %v608
    %676 = vmatprep.subr.mxu0 0.0
    %677 = vmatpush1.msra.mxu0 %v613
    %678 = vmatprep.subr.mxu0 0.0
    %679 = vmatpush1.msra.mxu0 %v618
    %680 = vmatprep.subr.mxu0 0.0
    %681 = vmatpush1.msra.mxu0 %v623
    %682 = vmatprep.subr.mxu0 0.0
    %683 = vmatpush1.msra.mxu0 %v628
    %684 = vmatprep.subr.mxu0 0.0
    %685 = vmatpush1.msra.mxu0 %v633
    %686 = vmatprep.subr.mxu0 0.0
    %687 = vmatpush1.msra.mxu0 %v638
    %688 = vmatprep.subr.mxu0 0.0
    %689 = vmatpush1.msra.mxu0 %v643
    %690 = vmatprep.subr.mxu0 0.0
    %691 = vmatpush1.msra.mxu0 %v648
    %692 = vmatprep.subr.mxu0 0.0
    %693 = vmatpush1.msra.mxu0 %v653
    %694 = vmatprep.subr.mxu0 0.0
    %695 = vmatpush1.msra.mxu0 0.0
    %696 = vmatprep.subr.mxu0 0.0
    %697 = vmatpush1.msra.mxu0 0.0
    %698 = vmatprep.subr.mxu0 0.0
    %699 = vmatpush1.msra.mxu0 0.0
    %700 = vmatprep.subr.mxu0 0.0
    %701 = vmatpush1.msra.mxu0 0.0
    %702 = vmatprep.subr.mxu0 0.0
    %703 = vmatpush1.msra.mxu0 0.0
    %704 = vmatprep.subr.mxu0 0.0
    %705 = vmatpush1.msra.mxu0 0.0
    %706 = vmatprep.subr.mxu0 0.0
    %707 = vmatpush1.msra.mxu0 0.0
    %708 = vmatprep.subr.mxu0 0.0
    %709 = vmatpush1.msra.mxu0 0.0
    %710 = vmatprep.subr.mxu0 0.0
    %711 = vmatpush1.msra.mxu0 0.0
    %712 = vmatprep.subr.mxu0 0.0
    %713 = vmatpush1.msra.mxu0 0.0
    %714 = vmatprep.subr.mxu0 0.0
    %715 = vmatpush1.msra.mxu0 0.0
    %716 = vmatprep.subr.mxu0 0.0
    %717 = vmatpush1.msra.mxu0 0.0
    %718 = vmatprep.subr.mxu0 0.0
    %719 = vmatpush1.msra.mxu0 0.0
    %720 = vmatprep.subr.mxu0 0.0
    %721 = vmatpush1.msra.mxu0 0.0
    %722 = vmatprep.subr.mxu0 0.0
    %723 = vmatpush1.msra.mxu0 0.0
    %724 = vmatprep.subr.mxu0 0.0
    %725 = vmatpush1.msra.mxu0 0.0
    %726 = vmatprep.mubr.f32.mxu0 0.0
    %727 = vmatmul.mubr.f32.gmra.mrb[0].mxu0 %v149
    %v728 = vpop.f32.mrb[0].mxu0
    %v729 = vadd.f32 %v660, %v728
    %v730 = vpop.f32.mrb[0].mxu0
    %731 = vmatprep.mubr.f32.mxu0 0.0
    %732 = vmatmul.mubr.f32.gmra.mrb[0].mxu0 %v150
    %v733 = vpop.f32.mrb[0].mxu0
    %v734 = vadd.f32 %v660, %v733
    %v735 = vpop.f32.mrb[0].mxu0
    %736 = vmatprep.mubr.f32.mxu0 0.0
    %737 = vmatmul.mubr.f32.gmra.mrb[0].mxu0 %v151
    %v738 = vpop.f32.mrb[0].mxu0
    %v739 = vadd.f32 %v660, %v738
    %v740 = vpop.f32.mrb[0].mxu0
    %741 = vmatprep.mubr.f32.mxu0 0.0
    %742 = vmatmul.mubr.f32.gmra.mrb[0].mxu0 %v152
    %v743 = vpop.f32.mrb[0].mxu0
    %v744 = vadd.f32 %v660, %v743
    %v745 = vpop.f32.mrb[0].mxu0
    %746 = vmatprep.mubr.f32.mxu0 0.0
    %747 = vmatmul.mubr.f32.gmra.mrb[0].mxu0 %v153
    %v748 = vpop.f32.mrb[0].mxu0
    %v749 = vadd.f32 %v660, %v748
    %v750 = vpop.f32.mrb[0].mxu0
    %751 = vmatprep.mubr.f32.mxu0 0.0
    %752 = vmatmul.mubr.f32.gmra.mrb[0].mxu0 %v154
    %v753 = vpop.f32.mrb[0].mxu0
    %v754 = vadd.f32 %v660, %v753
    %v755 = vpop.f32.mrb[0].mxu0
    %756 = vmatprep.mubr.f32.mxu0 0.0
    %757 = vmatmul.mubr.f32.gmra.mrb[0].mxu0 %v155
    %v758 = vpop.f32.mrb[0].mxu0
    %v759 = vadd.f32 %v660, %v758
    %v760 = vpop.f32.mrb[0].mxu0
    %761 = vmatprep.mubr.f32.mxu0 0.0
    %762 = vmatmul.mubr.f32.gmra.mrb[0].mxu0 %v156
    %v763 = vpop.f32.mrb[0].mxu0
    %v764 = vadd.f32 %v660, %v763
    %v765 = vpop.f32.mrb[0].mxu0
    %766 = vmatprep.mubr.f32.mxu0 0.0
    %767 = vmatmul.mubr.f32.gmra.mrb[0].mxu0 %v157
    %v768 = vpop.f32.mrb[0].mxu0
    %v769 = vadd.f32 %v660, %v768
    %v770 = vpop.f32.mrb[0].mxu0
    %771 = vmatprep.mubr.f32.mxu0 0.0
    %772 = vmatmul.mubr.f32.gmra.mrb[0].mxu0 %v158
    %v773 = vpop.f32.mrb[0].mxu0
    %v774 = vadd.f32 %v660, %v773
    %v775 = vpop.f32.mrb[0].mxu0
    %776 = vmatprep.mubr.f32.mxu0 0.0
    %777 = vmatmul.mubr.f32.gmra.mrb[0].mxu0 %v159
    %v778 = vpop.f32.mrb[0].mxu0
    %v779 = vadd.f32 %v660, %v778
    %v780 = vpop.f32.mrb[0].mxu0
    %781 = vmatprep.mubr.f32.mxu0 0.0
    %782 = vmatmul.mubr.f32.gmra.mrb[0].mxu0 %v160
    %v783 = vpop.f32.mrb[0].mxu0
    %v784 = vadd.f32 %v660, %v783
    %v785 = vpop.f32.mrb[0].mxu0
    %786 = vmatprep.mubr.f32.mxu0 0.0
    %787 = vmatmul.mubr.f32.gmra.mrb[0].mxu0 %v161
    %v788 = vpop.f32.mrb[0].mxu0
    %v789 = vadd.f32 %v660, %v788
    %v790 = vpop.f32.mrb[0].mxu0
    %791 = vmatprep.mubr.f32.mxu0 0.0
    %792 = vmatmul.mubr.f32.gmra.mrb[0].mxu0 %v162
    %v793 = vpop.f32.mrb[0].mxu0
    %v794 = vadd.f32 %v660, %v793
    %v795 = vpop.f32.mrb[0].mxu0
    %796 = vmatprep.mubr.f32.mxu0 0.0
    %797 = vmatmul.mubr.f32.gmra.mrb[0].mxu0 %v163
    %v798 = vpop.f32.mrb[0].mxu0
    %v799 = vadd.f32 %v660, %v798
    %v800 = vpop.f32.mrb[0].mxu0
    %801 = vmatprep.mubr.f32.mxu0 0.0
    %802 = vmatmul.mubr.f32.gmra.mrb[0].mxu0 %v164
    %v803 = vpop.f32.mrb[0].mxu0
    %v804 = vadd.f32 %v660, %v803
    %v805 = vpop.f32.mrb[0].mxu0
    %806 = vdwg.mxu0
    %v807 = vmax.f32 %v729, 0.0
    %v808 = vmax.f32 %v734, 0.0
    %v809 = vmax.f32 %v739, 0.0
    %v810 = vmax.f32 %v744, 0.0
    %v811 = vmax.f32 %v749, 0.0
    %v812 = vmax.f32 %v754, 0.0
    %v813 = vmax.f32 %v759, 0.0
    %v814 = vmax.f32 %v764, 0.0
    %v815 = vmax.f32 %v769, 0.0
    %v816 = vmax.f32 %v774, 0.0
    %v817 = vmax.f32 %v779, 0.0
    %v818 = vmax.f32 %v784, 0.0
    %v819 = vmax.f32 %v789, 0.0
    %v820 = vmax.f32 %v794, 0.0
    %v821 = vmax.f32 %v799, 0.0
    %v822 = vmax.f32 %v804, 0.0
    %v823 = vld [vmem:[#allocation13] sm:$0xff]
    %v824 = vld [vmem:[#allocation13 + $0x8] sm:$0xff]
    %v825 = vld [vmem:[#allocation13 + $0x10] sm:$0xff]
    %v826 = vld [vmem:[#allocation13 + $0x18] sm:$0xff]
    %v827 = vld [vmem:[#allocation13 + $0x20] sm:$0xff]
    %v828 = vld [vmem:[#allocation13 + $0x28] sm:$0xff]
    %v829 = vld [vmem:[#allocation13 + $0x30] sm:$0xff]
    %v830 = vld [vmem:[#allocation13 + $0x38] sm:$0xff]
    %v831 = vld [vmem:[#allocation13 + $0x40] sm:$0xff]
    %v832 = vld [vmem:[#allocation13 + $0x48] sm:$0xff]
    %v833 = vld [vmem:[#allocation13 + $0x50] sm:$0xff]
    %v834 = vld [vmem:[#allocation13 + $0x58] sm:$0xff]
    %v835 = vld [vmem:[#allocation13 + $0x60] sm:$0xff]
    %v836 = vld [vmem:[#allocation13 + $0x68] sm:$0xff]
    %v837 = vld [vmem:[#allocation13 + $0x70] sm:$0xff]
    %v838 = vld [vmem:[#allocation13 + $0x78] sm:$0xff]
    %v839 = vld [vmem:[#allocation14] sm:$0x1]
    %v841 = vlaneseq
    %v842 = vshrl.u32 %v841, 7
    %v843 = vsub.s32 0, %v842
    %v844 = vrot.slane %v839, %v843
    %846 = vmatprep.subr.mxu0 0.0
    %847 = vmatpush1.msra.mxu0 %v823
    %848 = vmatprep.subr.mxu0 0.0
    %849 = vmatpush1.msra.mxu0 %v824
    %850 = vmatprep.subr.mxu0 0.0
    %851 = vmatpush1.msra.mxu0 %v825
    %852 = vmatprep.subr.mxu0 0.0
    %853 = vmatpush1.msra.mxu0 %v826
    %854 = vmatprep.subr.mxu0 0.0
    %855 = vmatpush1.msra.mxu0 %v827
    %856 = vmatprep.subr.mxu0 0.0
    %857 = vmatpush1.msra.mxu0 %v828
    %858 = vmatprep.subr.mxu0 0.0
    %859 = vmatpush1.msra.mxu0 %v829
    %860 = vmatprep.subr.mxu0 0.0
    %861 = vmatpush1.msra.mxu0 %v830
    %862 = vmatprep.subr.mxu0 0.0
    %863 = vmatpush1.msra.mxu0 %v831
    %864 = vmatprep.subr.mxu0 0.0
    %865 = vmatpush1.msra.mxu0 %v832
    %866 = vmatprep.subr.mxu0 0.0
    %867 = vmatpush1.msra.mxu0 %v833
    %868 = vmatprep.subr.mxu0 0.0
    %869 = vmatpush1.msra.mxu0 %v834
    %870 = vmatprep.subr.mxu0 0.0
    %871 = vmatpush1.msra.mxu0 %v835
    %872 = vmatprep.subr.mxu0 0.0
    %873 = vmatpush1.msra.mxu0 %v836
    %874 = vmatprep.subr.mxu0 0.0
    %875 = vmatpush1.msra.mxu0 %v837
    %876 = vmatprep.subr.mxu0 0.0
    %877 = vmatpush1.msra.mxu0 %v838
    %878 = vmatprep.subr.mxu0 0.0
    %879 = vmatpush1.msra.mxu0 0.0
    %880 = vmatprep.subr.mxu0 0.0
    %881 = vmatpush1.msra.mxu0 0.0
    %882 = vmatprep.subr.mxu0 0.0
    %883 = vmatpush1.msra.mxu0 0.0
    %884 = vmatprep.subr.mxu0 0.0
    %885 = vmatpush1.msra.mxu0 0.0
    %886 = vmatprep.subr.mxu0 0.0
    %887 = vmatpush1.msra.mxu0 0.0
    %888 = vmatprep.subr.mxu0 0.0
    %889 = vmatpush1.msra.mxu0 0.0
    %890 = vmatprep.subr.mxu0 0.0
    %891 = vmatpush1.msra.mxu0 0.0
    %892 = vmatprep.subr.mxu0 0.0
    %893 = vmatpush1.msra.mxu0 0.0
    %894 = vmatprep.subr.mxu0 0.0
    %895 = vmatpush1.msra.mxu0 0.0
    %896 = vmatprep.subr.mxu0 0.0
    %897 = vmatpush1.msra.mxu0 0.0
    %898 = vmatprep.subr.mxu0 0.0
    %899 = vmatpush1.msra.mxu0 0.0
    %900 = vmatprep.subr.mxu0 0.0
    %901 = vmatpush1.msra.mxu0 0.0
    %902 = vmatprep.subr.mxu0 0.0
    %903 = vmatpush1.msra.mxu0 0.0
    %904 = vmatprep.subr.mxu0 0.0
    %905 = vmatpush1.msra.mxu0 0.0
    %906 = vmatprep.subr.mxu0 0.0
    %907 = vmatpush1.msra.mxu0 0.0
    %908 = vmatprep.subr.mxu0 0.0
    %909 = vmatpush1.msra.mxu0 0.0
    %910 = vmatprep.mubr.f32.mxu0 0.0
    %911 = vmatmul.mubr.f32.gmra.mrb[0].mxu0 %v807
    %v912 = vpop.f32.mrb[0].mxu0
    %v913 = vadd.f32 %v844, %v912
    %v914 = vpop.f32.mrb[0].mxu0
    %915 = vmatprep.mubr.f32.mxu0 0.0
    %916 = vmatmul.mubr.f32.gmra.mrb[0].mxu0 %v808
    %v917 = vpop.f32.mrb[0].mxu0
    %v918 = vadd.f32 %v844, %v917
    %v919 = vpop.f32.mrb[0].mxu0
    %920 = vmatprep.mubr.f32.mxu0 0.0
    %921 = vmatmul.mubr.f32.gmra.mrb[0].mxu0 %v809
    %v922 = vpop.f32.mrb[0].mxu0
    %v923 = vadd.f32 %v844, %v922
    %v924 = vpop.f32.mrb[0].mxu0
    %925 = vmatprep.mubr.f32.mxu0 0.0
    %926 = vmatmul.mubr.f32.gmra.mrb[0].mxu0 %v810
    %v927 = vpop.f32.mrb[0].mxu0
    %v928 = vadd.f32 %v844, %v927
    %v929 = vpop.f32.mrb[0].mxu0
    %930 = vmatprep.mubr.f32.mxu0 0.0
    %931 = vmatmul.mubr.f32.gmra.mrb[0].mxu0 %v811
    %v932 = vpop.f32.mrb[0].mxu0
    %v933 = vadd.f32 %v844, %v932
    %v934 = vpop.f32.mrb[0].mxu0
    %935 = vmatprep.mubr.f32.mxu0 0.0
    %936 = vmatmul.mubr.f32.gmra.mrb[0].mxu0 %v812
    %v937 = vpop.f32.mrb[0].mxu0
    %v938 = vadd.f32 %v844, %v937
    %v939 = vpop.f32.mrb[0].mxu0
    %940 = vmatprep.mubr.f32.mxu0 0.0
    %941 = vmatmul.mubr.f32.gmra.mrb[0].mxu0 %v813
    %v942 = vpop.f32.mrb[0].mxu0
    %v943 = vadd.f32 %v844, %v942
    %v944 = vpop.f32.mrb[0].mxu0
    %945 = vmatprep.mubr.f32.mxu0 0.0
    %946 = vmatmul.mubr.f32.gmra.mrb[0].mxu0 %v814
    %v947 = vpop.f32.mrb[0].mxu0
    %v948 = vadd.f32 %v844, %v947
    %v949 = vpop.f32.mrb[0].mxu0
    %950 = vmatprep.mubr.f32.mxu0 0.0
    %951 = vmatmul.mubr.f32.gmra.mrb[0].mxu0 %v815
    %v952 = vpop.f32.mrb[0].mxu0
    %v953 = vadd.f32 %v844, %v952
    %v954 = vpop.f32.mrb[0].mxu0
    %955 = vmatprep.mubr.f32.mxu0 0.0
    %956 = vmatmul.mubr.f32.gmra.mrb[0].mxu0 %v816
    %v957 = vpop.f32.mrb[0].mxu0
    %v958 = vadd.f32 %v844, %v957
    %v959 = vpop.f32.mrb[0].mxu0
    %960 = vmatprep.mubr.f32.mxu0 0.0
    %961 = vmatmul.mubr.f32.gmra.mrb[0].mxu0 %v817
    %v962 = vpop.f32.mrb[0].mxu0
    %v963 = vadd.f32 %v844, %v962
    %v964 = vpop.f32.mrb[0].mxu0
    %965 = vmatprep.mubr.f32.mxu0 0.0
    %966 = vmatmul.mubr.f32.gmra.mrb[0].mxu0 %v818
    %v967 = vpop.f32.mrb[0].mxu0
    %v968 = vadd.f32 %v844, %v967
    %v969 = vpop.f32.mrb[0].mxu0
    %970 = vmatprep.mubr.f32.mxu0 0.0
    %971 = vmatmul.mubr.f32.gmra.mrb[0].mxu0 %v819
    %v972 = vpop.f32.mrb[0].mxu0
    %v973 = vadd.f32 %v844, %v972
    %v974 = vpop.f32.mrb[0].mxu0
    %975 = vmatprep.mubr.f32.mxu0 0.0
    %976 = vmatmul.mubr.f32.gmra.mrb[0].mxu0 %v820
    %v977 = vpop.f32.mrb[0].mxu0
    %v978 = vadd.f32 %v844, %v977
    %v979 = vpop.f32.mrb[0].mxu0
    %980 = vmatprep.mubr.f32.mxu0 0.0
    %981 = vmatmul.mubr.f32.gmra.mrb[0].mxu0 %v821
    %v982 = vpop.f32.mrb[0].mxu0
    %v983 = vadd.f32 %v844, %v982
    %v984 = vpop.f32.mrb[0].mxu0
    %985 = vmatprep.mubr.f32.mxu0 0.0
    %986 = vmatmul.mubr.f32.gmra.mrb[0].mxu0 %v822
    %v987 = vpop.f32.mrb[0].mxu0
    %v988 = vadd.f32 %v844, %v987
    %v989 = vpop.f32.mrb[0].mxu0
    %990 = vdwg.mxu0
    %v991 = vlaneseq
    %v992 = vand.u32 %v991, 127
    %vm993 = vcmp.lt.s32.totalorder %v992, 8
    %v994 = vsel %vm993, %v913, -1e+30
    %v995 = vsel %vm993, %v918, -1e+30
    %v996 = vsel %vm993, %v923, -1e+30
    %v997 = vsel %vm993, %v928, -1e+30
    %v998 = vsel %vm993, %v933, -1e+30
    %v999 = vsel %vm993, %v938, -1e+30
    %v1000 = vsel %vm993, %v943, -1e+30
    %v1001 = vsel %vm993, %v948, -1e+30
    %v1002 = vsel %vm993, %v953, -1e+30
    %v1003 = vsel %vm993, %v958, -1e+30
    %v1004 = vsel %vm993, %v963, -1e+30
    %v1005 = vsel %vm993, %v968, -1e+30
    %v1006 = vsel %vm993, %v973, -1e+30
    %v1007 = vsel %vm993, %v978, -1e+30
    %v1008 = vsel %vm993, %v983, -1e+30
    %v1009 = vsel %vm993, %v988, -1e+30
    %1010 = vmax.xlane.f32.xlu0 %v994
    %v1011 = vpop.xlane.xlu0 %1010
    %1012 = vmax.xlane.f32.xlu0 %v995
    %v1013 = vpop.xlane.xlu0 %1012
    %1014 = vmax.xlane.f32.xlu0 %v996
    %v1015 = vpop.xlane.xlu0 %1014
    %1016 = vmax.xlane.f32.xlu0 %v997
    %v1017 = vpop.xlane.xlu0 %1016
    %1018 = vmax.xlane.f32.xlu0 %v998
    %v1019 = vpop.xlane.xlu0 %1018
    %1020 = vmax.xlane.f32.xlu0 %v999
    %v1021 = vpop.xlane.xlu0 %1020
    %1022 = vmax.xlane.f32.xlu0 %v1000
    %v1023 = vpop.xlane.xlu0 %1022
    %1024 = vmax.xlane.f32.xlu0 %v1001
    %v1025 = vpop.xlane.xlu0 %1024
    %1026 = vmax.xlane.f32.xlu0 %v1002
    %v1027 = vpop.xlane.xlu0 %1026
    %1028 = vmax.xlane.f32.xlu0 %v1003
    %v1029 = vpop.xlane.xlu0 %1028
    %1030 = vmax.xlane.f32.xlu0 %v1004
    %v1031 = vpop.xlane.xlu0 %1030
    %1032 = vmax.xlane.f32.xlu0 %v1005
    %v1033 = vpop.xlane.xlu0 %1032
    %1034 = vmax.xlane.f32.xlu0 %v1006
    %v1035 = vpop.xlane.xlu0 %1034
    %1036 = vmax.xlane.f32.xlu0 %v1007
    %v1037 = vpop.xlane.xlu0 %1036
    %1038 = vmax.xlane.f32.xlu0 %v1008
    %v1039 = vpop.xlane.xlu0 %1038
    %1040 = vmax.xlane.f32.xlu0 %v1009
    %v1041 = vpop.xlane.xlu0 %1040
    %v1042 = vsub.f32 %v994, %v1011
    %v1043 = vsub.f32 %v995, %v1013
    %v1044 = vsub.f32 %v996, %v1015
    %v1045 = vsub.f32 %v997, %v1017
    %v1046 = vsub.f32 %v998, %v1019
    %v1047 = vsub.f32 %v999, %v1021
    %v1048 = vsub.f32 %v1000, %v1023
    %v1049 = vsub.f32 %v1001, %v1025
    %v1050 = vsub.f32 %v1002, %v1027
    %v1051 = vsub.f32 %v1003, %v1029
    %v1052 = vsub.f32 %v1004, %v1031
    %v1053 = vsub.f32 %v1005, %v1033
    %v1054 = vsub.f32 %v1006, %v1035
    %v1055 = vsub.f32 %v1007, %v1037
    %v1056 = vsub.f32 %v1008, %v1039
    %v1057 = vsub.f32 %v1009, %v1041
    %v1058 = vmul.f32 %v1042, 1.442695
    %v1059 = vpow.pop %v1058
    %v1060 = vmul.f32 %v1043, 1.442695
    %v1061 = vpow.pop %v1060
    %v1062 = vmul.f32 %v1044, 1.442695
    %v1063 = vpow.pop %v1062
    %v1064 = vmul.f32 %v1045, 1.442695
    %v1065 = vpow.pop %v1064
    %v1066 = vmul.f32 %v1046, 1.442695
    %v1067 = vpow.pop %v1066
    %v1068 = vmul.f32 %v1047, 1.442695
    %v1069 = vpow.pop %v1068
    %v1070 = vmul.f32 %v1048, 1.442695
    %v1071 = vpow.pop %v1070
    %v1072 = vmul.f32 %v1049, 1.442695
    %v1073 = vpow.pop %v1072
    %v1074 = vmul.f32 %v1050, 1.442695
    %v1075 = vpow.pop %v1074
    %v1076 = vmul.f32 %v1051, 1.442695
    %v1077 = vpow.pop %v1076
    %v1078 = vmul.f32 %v1052, 1.442695
    %v1079 = vpow.pop %v1078
    %v1080 = vmul.f32 %v1053, 1.442695
    %v1081 = vpow.pop %v1080
    %v1082 = vmul.f32 %v1054, 1.442695
    %v1083 = vpow.pop %v1082
    %v1084 = vmul.f32 %v1055, 1.442695
    %v1085 = vpow.pop %v1084
    %v1086 = vmul.f32 %v1056, 1.442695
    %v1087 = vpow.pop %v1086
    %v1088 = vmul.f32 %v1057, 1.442695
    %v1089 = vpow.pop %v1088
    %1090 = vadd.xlane.f32.xlu0 %v1059
    %v1091 = vpop.xlane.xlu0 %1090
    %1092 = vadd.xlane.f32.xlu0 %v1061
    %v1093 = vpop.xlane.xlu0 %1092
    %1094 = vadd.xlane.f32.xlu0 %v1063
    %v1095 = vpop.xlane.xlu0 %1094
    %1096 = vadd.xlane.f32.xlu0 %v1065
    %v1097 = vpop.xlane.xlu0 %1096
    %1098 = vadd.xlane.f32.xlu0 %v1067
    %v1099 = vpop.xlane.xlu0 %1098
    %1100 = vadd.xlane.f32.xlu0 %v1069
    %v1101 = vpop.xlane.xlu0 %1100
    %1102 = vadd.xlane.f32.xlu0 %v1071
    %v1103 = vpop.xlane.xlu0 %1102
    %1104 = vadd.xlane.f32.xlu0 %v1073
    %v1105 = vpop.xlane.xlu0 %1104
    %1106 = vadd.xlane.f32.xlu0 %v1075
    %v1107 = vpop.xlane.xlu0 %1106
    %1108 = vadd.xlane.f32.xlu0 %v1077
    %v1109 = vpop.xlane.xlu0 %1108
    %1110 = vadd.xlane.f32.xlu0 %v1079
    %v1111 = vpop.xlane.xlu0 %1110
    %1112 = vadd.xlane.f32.xlu0 %v1081
    %v1113 = vpop.xlane.xlu0 %1112
    %1114 = vadd.xlane.f32.xlu0 %v1083
    %v1115 = vpop.xlane.xlu0 %1114
    %1116 = vadd.xlane.f32.xlu0 %v1085
    %v1117 = vpop.xlane.xlu0 %1116
    %1118 = vadd.xlane.f32.xlu0 %v1087
    %v1119 = vpop.xlane.xlu0 %1118
    %1120 = vadd.xlane.f32.xlu0 %v1089
    %v1121 = vpop.xlane.xlu0 %1120
    %v1122 = vlog2.pop %v1091
    %v1123 = vmul.f32 %v1122, 0.6931472
    %v1124 = vlog2.pop %v1093
    %v1125 = vmul.f32 %v1124, 0.6931472
    %v1126 = vlog2.pop %v1095
    %v1127 = vmul.f32 %v1126, 0.6931472
    %v1128 = vlog2.pop %v1097
    %v1129 = vmul.f32 %v1128, 0.6931472
    %v1130 = vlog2.pop %v1099
    %v1131 = vmul.f32 %v1130, 0.6931472
    %v1132 = vlog2.pop %v1101
    %v1133 = vmul.f32 %v1132, 0.6931472
    %v1134 = vlog2.pop %v1103
    %v1135 = vmul.f32 %v1134, 0.6931472
    %v1136 = vlog2.pop %v1105
    %v1137 = vmul.f32 %v1136, 0.6931472
    %v1138 = vlog2.pop %v1107
    %v1139 = vmul.f32 %v1138, 0.6931472
    %v1140 = vlog2.pop %v1109
    %v1141 = vmul.f32 %v1140, 0.6931472
    %v1142 = vlog2.pop %v1111
    %v1143 = vmul.f32 %v1142, 0.6931472
    %v1144 = vlog2.pop %v1113
    %v1145 = vmul.f32 %v1144, 0.6931472
    %v1146 = vlog2.pop %v1115
    %v1147 = vmul.f32 %v1146, 0.6931472
    %v1148 = vlog2.pop %v1117
    %v1149 = vmul.f32 %v1148, 0.6931472
    %v1150 = vlog2.pop %v1119
    %v1151 = vmul.f32 %v1150, 0.6931472
    %v1152 = vlog2.pop %v1121
    %v1153 = vmul.f32 %v1152, 0.6931472
    %v1154 = vsub.f32 %v1042, %v1123
    %v1155 = vsub.f32 %v1043, %v1125
    %v1156 = vsub.f32 %v1044, %v1127
    %v1157 = vsub.f32 %v1045, %v1129
    %v1158 = vsub.f32 %v1046, %v1131
    %v1159 = vsub.f32 %v1047, %v1133
    %v1160 = vsub.f32 %v1048, %v1135
    %v1161 = vsub.f32 %v1049, %v1137
    %v1162 = vsub.f32 %v1050, %v1139
    %v1163 = vsub.f32 %v1051, %v1141
    %v1164 = vsub.f32 %v1052, %v1143
    %v1165 = vsub.f32 %v1053, %v1145
    %v1166 = vsub.f32 %v1054, %v1147
    %v1167 = vsub.f32 %v1055, %v1149
    %v1168 = vsub.f32 %v1056, %v1151
    %v1169 = vsub.f32 %v1057, %v1153
    %1170 = vst [vmem:[#allocation16] sm:$0xff] %v1154
    %1171 = vst [vmem:[#allocation16 + $0x8] sm:$0xff] %v1155
    %1172 = vst [vmem:[#allocation16 + $0x10] sm:$0xff] %v1156
    %1173 = vst [vmem:[#allocation16 + $0x18] sm:$0xff] %v1157
    %1174 = vst [vmem:[#allocation16 + $0x20] sm:$0xff] %v1158
    %1175 = vst [vmem:[#allocation16 + $0x28] sm:$0xff] %v1159
    %1176 = vst [vmem:[#allocation16 + $0x30] sm:$0xff] %v1160
    %1177 = vst [vmem:[#allocation16 + $0x38] sm:$0xff] %v1161
    %1178 = vst [vmem:[#allocation16 + $0x40] sm:$0xff] %v1162
    %1179 = vst [vmem:[#allocation16 + $0x48] sm:$0xff] %v1163
    %1180 = vst [vmem:[#allocation16 + $0x50] sm:$0xff] %v1164
    %1181 = vst [vmem:[#allocation16 + $0x58] sm:$0xff] %v1165
    %1182 = vst [vmem:[#allocation16 + $0x60] sm:$0xff] %v1166
    %1183 = vst [vmem:[#allocation16 + $0x68] sm:$0xff] %v1167
    %1184 = vst [vmem:[#allocation16 + $0x70] sm:$0xff] %v1168
    %1185 = vst [vmem:[#allocation16 + $0x78] sm:$0xff] %v1169
    // Predicated region
    $region66: #{tpu_custom_call.1} parent=1 // pred_check
      _
    $region67: #{tpu_custom_call.1} parent=1 // pred_check_branch
      %1187 = sbr.rel (0) target = $region69
    $region68: #{tpu_custom_call.1} parent=1 // pred_region
      %s1189 = ssub.s32 2048, 2048
      %1190 = vsyncadd [#allocation4], %s1189
      %s1191 = sshll.u32 [#allocation16], 4
      %s1192 = int_to_ptr.vmem [resolvable:$true] %s1191
      %1197 = dma.vmem_to_hbm [thread:$0]  %s1192, 2048, %s8, [#allocation4], 128, 128, 8
    $region69: #{tpu_custom_call.1} parent=1 // pred_fallthru
      _
    // Predicated region
    $region70: #{tpu_custom_call.1} parent=1 // pred_check
      _
    $region71: #{tpu_custom_call.1} parent=1 // pred_check_branch
      %1199 = sbr.rel (0) target = $region73
    $region72: #{tpu_custom_call.1} parent=1 // pred_region
      %1200 = dma.done [#allocation4], 2048
    $region73: #{tpu_custom_call.1} parent=1 // pred_fallthru
      _
    %1201 = vsyncpa [#allocation3], 1
    %1202 = vsyncpa [#allocation6], 1
    %1203 = vsyncpa [#allocation9], 1
    %1204 = vsyncpa [#allocation12], 1
    %1205 = vsyncpa [#allocation15], 1
    %1206 = vsyncpa [#allocation4], 1

</llo_original>
